<compile_context>
chip_gen: v5e
topology: v5e:2x2
jax: 0.10.0
libtpu: 0.0.40
codegen_flags: <defaults>
</compile_context>

<pallas_src>
import numpy as np
import jax
import jax.numpy as jnp
from jax import lax
from jax.experimental import pallas as pl
from jax.experimental.pallas import tpu as pltpu

LEAKY_SLOPE = 0.1
BN_EPS = 1e-5


# ---------------------------------------------------------------------------
# Shared forward math (used verbatim by the kernel body and by the reference,
# so the correctness check is against the exact same computation).
# ---------------------------------------------------------------------------
def _forward_math(x_bf16, params, use_bf16_epilogue):
    """params = ((w1,b1),(w2,b2),(w3t,b3t),(w4t,b4t),(w5t,b5t),(w6t,b6)).

    Layers 1-2 are batch-on-sublane (TB, dout); layers 3-6 use transposed weights and are
    batch-on-lane (dout, TB). Returns the lane-dense (1, TB) output row (f32).
    """

    def epilogue(acc):
        if use_bf16_epilogue:
            h = acc.astype(jnp.bfloat16)
            return jnp.maximum(h, LEAKY_SLOPE * h)          # bf16 VALU (v6e/v7x)
        h = jnp.maximum(acc, LEAKY_SLOPE * acc)              # f32 VALU (v5e-safe)
        return h.astype(jnp.bfloat16)

    (w1, b1), (w2, b2), (w3t, b3t), (w4t, b4t), (w5t, b5t), (w6t, b6) = params

    # Wide layers: batch on sublanes, features on lanes (128 / 64 wide).
    h = epilogue(jnp.dot(x_bf16, w1, preferred_element_type=jnp.float32) + b1)   # (TB, 128)
    h = epilogue(jnp.dot(h, w2, preferred_element_type=jnp.float32) + b2)        # (TB, 64)

    # Narrow tail: switch to batch-on-lane by contracting the feature axis of h
    # against the pre-transposed weight (32, 64) -> (32, TB). No in-kernel transpose.
    ht = epilogue(
        lax.dot_general(w3t, h, (((1,), (1,)), ((), ())),
                        preferred_element_type=jnp.float32) + b3t)               # (32, TB)
    ht = epilogue(jnp.dot(w4t, ht, preferred_element_type=jnp.float32) + b4t)    # (16, TB)
    ht = epilogue(jnp.dot(w5t, ht, preferred_element_type=jnp.float32) + b5t)    # (8, TB)
    out = jnp.dot(w6t, ht, preferred_element_type=jnp.float32) + b6              # (1, TB)
    return out


def make_waternet_kernel(use_bf16_epilogue):
    def kernel(x_ref,
               w1_ref, b1_ref, w2_ref, b2_ref,
               w3t_ref, b3t_ref, w4t_ref, b4t_ref,
               w5t_ref, b5t_ref, w6t_ref, b6_ref,
               out_ref):
        params = (
            (w1_ref[...], b1_ref[...]),
            (w2_ref[...], b2_ref[...]),
            (w3t_ref[...], b3t_ref[...]),
            (w4t_ref[...], b4t_ref[...]),
            (w5t_ref[...], b5t_ref[...]),
            (w6t_ref[...], b6_ref[...]),
        )
        out = _forward_math(x_ref[...], params, use_bf16_epilogue)   # (1, TB) f32
        out_ref[...] = out.astype(out_ref.dtype)

    return kernel


# ---------------------------------------------------------------------------
# Parameter handling
# ---------------------------------------------------------------------------
def init_waternet_params(key, input_dim):
    """Deterministic parameter init (PyTorch-style uniform bounds)."""
    dims = [input_dim, 128, 64, 32, 16, 8, 1]
    keys = jax.random.split(key, len(dims) - 1)
    linears = []
    for i, (din, dout) in enumerate(zip(dims[:-1], dims[1:])):
        bound = 1.0 / float(np.sqrt(din))
        w = jax.random.uniform(keys[i], (din, dout), jnp.float32, -bound, bound)
        b = jax.random.uniform(
            jax.random.fold_in(keys[i], 1), (1, dout), jnp.float32, -bound, bound
        )
        linears.append((w, b))

    # BatchNorm1d defaults: gamma=1, beta=0, running_mean=0, running_var=1.
    bns = []
    for d in (128, 64, 32, 16):
        bns.append((jnp.ones((1, d), jnp.float32), jnp.zeros((1, d), jnp.float32),
                    jnp.zeros((1, d), jnp.float32), jnp.ones((1, d), jnp.float32)))
    return linears, bns


def _fold_params(linears, bns):
    """Fold inference-mode BN and the Linear bias into (W'[din,dout] f32, b'[1,dout] f32)."""
    folded = []
    for i in range(6):
        w, b = linears[i]
        w = w.astype(jnp.float32)
        b = b.astype(jnp.float32)
        if i < 4:
            gamma, beta, mean, var = bns[i]
            scale = gamma / jnp.sqrt(var + BN_EPS)      # (1, dout)
            shift = beta - mean * scale
            w = w * scale
            b = b * scale + shift
        folded.append((w, b))
    return folded


def _kernel_params(folded):
    """Kernel layout: layers 1-2 as (din,dout) bf16 + (1,dout) f32 bias; layers 3-6
    pre-transposed to (dout,din) bf16 + (dout,1) f32 bias (batch-on-lane tail)."""
    out = []
    for i, (w, b) in enumerate(folded):
        if i < 2:
            out.append((w.astype(jnp.bfloat16), b))          # (din, dout), (1, dout)
        else:
            out.append((w.T.astype(jnp.bfloat16), b.T))       # (dout, din), (dout, 1)
    return out


# ---------------------------------------------------------------------------
# Wrapper
# ---------------------------------------------------------------------------
def _default_bf16_epilogue():
    """bf16 epilogue only on chips with a bf16 VPU (v6e/v7x); f32 on v5 and older."""
    try:
        kind = jax.devices()[0].device_kind.lower()
    except Exception:
        return False
    return not any(tok in kind for tok in ("v2", "v3", "v4", "v5"))


def _choose_tile_b(B):
    # Lane-dense output requires TB % 128 == 0.  Prefer the largest tile that still
    # yields >= 2 grid steps (so v7x's two TensorCores both get work); otherwise the
    # largest tile <= B; otherwise 128 (padded).  Working set at TB=8192 is only a few
    # MiB, well inside every generation's scoped-VMEM budget with the 32 MiB limit below.
    candidates = (8192, 4096, 2048, 1024, 512, 256, 128)
    for tb in candidates:
        if B >= 2 * tb:
            return tb
    for tb in candidates:
        if B >= tb:
            return tb
    return 128


def waternet_forward(x, linears, bns, use_bf16_epilogue=None):
    if use_bf16_epilogue is None:
        use_bf16_epilogue = _default_bf16_epilogue()

    B, F = x.shape
    params = _kernel_params(_fold_params(linears, bns))

    TB = _choose_tile_b(B)
    num_tiles = pl.cdiv(B, TB)
    B_pad = num_tiles * TB

    x_bf16 = x.astype(jnp.bfloat16)
    if B_pad != B:
        x_bf16 = jnp.pad(x_bf16, ((0, B_pad - B), (0, 0)))

    flat_params = [a for wb in params for a in wb]

    in_specs = [pl.BlockSpec((TB, F), lambda i: (i, 0))]
    # Weights/biases: constant block index -> fetched once, VMEM-resident across the grid.
    in_specs += [pl.BlockSpec(p.shape, lambda i: (0, 0)) for p in flat_params]

    # Lane-dense output: one (1, TB) row per tile (batch on the lane axis).
    out_specs = pl.BlockSpec((None, 1, TB), lambda i: (i, 0, 0))
    out_shape = jax.ShapeDtypeStruct((num_tiles, 1, TB), jnp.float32)

    weight_bytes = sum(int(w.size) * 2 + int(b.size) * 4 for w, b in params)
    cost = pl.CostEstimate(
        flops=2 * B_pad * sum(int(w.size) for w, _ in params),
        transcendentals=0,
        bytes_accessed=B_pad * F * 2 + B_pad * 4 + weight_bytes,
    )

    out = pl.pallas_call(
        make_waternet_kernel(use_bf16_epilogue),
        grid=(num_tiles,),
        in_specs=in_specs,
        out_specs=out_specs,
        out_shape=out_shape,
        compiler_params=pltpu.CompilerParams(
            dimension_semantics=("parallel",),   # v7x: shard batch tiles over both TCs
            vmem_limit_bytes=32 * 1024 * 1024,   # safe on v7x's 64 MiB; ample up to TB=8192
        ),
        cost_estimate=cost,
    )(x_bf16, *flat_params)

    # (num_tiles, 1, TB) -> (B_pad, 1), tiles are contiguous along the batch.
    return out.reshape(B_pad, 1)[:B]


# ---------------------------------------------------------------------------
# References
# ---------------------------------------------------------------------------
def waternet_reference(x, linears, bns, use_bf16_epilogue):
    """Pure-JAX reference using exactly the kernel's math (same folding, orientation,
    bf16 MXU inputs, f32 accumulation, identical epilogue)."""
    params = _kernel_params(_fold_params(linears, bns))
    out = _forward_math(x.astype(jnp.bfloat16), params, use_bf16_epilogue)  # (1, B)
    return out.T                                                            # (B, 1)


def waternet_reference_f32(x, linears, bns):
    """Full-f32 reference (PyTorch eval-mode semantics, no bf16 quantization)."""
    h = x.astype(jnp.float32)
    for i in range(4):
        w, b = linears[i]
        gamma, beta, mean, var = bns[i]
        h = h @ w + b
        h = (h - mean) / jnp.sqrt(var + BN_EPS) * gamma + beta
        h = jnp.maximum(h, LEAKY_SLOPE * h)
    w, b = linears[4]
    h = h @ w + b
    h = jnp.maximum(h, LEAKY_SLOPE * h)
    w, b = linears[5]
    return h @ w + b


if __name__ == "__main__":
    key = jax.random.PRNGKey(0)
    k_x, k_p, k_x2 = jax.random.split(key, 3)

    input_dim = 16
    linears, bns = init_waternet_params(k_p, input_dim)
    use_bf16_ep = _default_bf16_epilogue()

    # Small single-tile case (B=8, padded to one 128-row tile).
    x = jax.random.normal(k_x, (8, input_dim), jnp.float32)
    out = jax.block_until_ready(waternet_forward(x, linears, bns, use_bf16_ep))
    ref = waternet_reference(x, linears, bns, use_bf16_ep)
    np.testing.assert_allclose(np.asarray(out), np.asarray(ref), rtol=5e-3, atol=5e-3)
    # Loose sanity check vs pure-f32 PyTorch-eval semantics (difference = bf16 quantization).
    ref32 = waternet_reference_f32(x, linears, bns)
    np.testing.assert_allclose(np.asarray(out), np.asarray(ref32), rtol=1e-1, atol=5e-2)

    # Multi-tile case: exercises the batch grid, resident-weight reuse, and padding path.
    x2 = jax.random.normal(k_x2, (384, input_dim), jnp.float32)
    out2 = jax.block_until_ready(waternet_forward(x2, linears, bns, use_bf16_ep))
    ref2 = waternet_reference(x2, linears, bns, use_bf16_ep)
    np.testing.assert_allclose(np.asarray(out2), np.asarray(ref2), rtol=5e-3, atol=5e-3)

    print("KERNEL_OK")
</pallas_src>

<mosaic_0001>
module attributes {stable_mosaic.version = 11 : i64} {
  func.func @kernel(%arg0: i32, %arg1: memref<128x16xbf16, #tpu.memory_space<vmem>>, %arg2: memref<16x128xbf16, #tpu.memory_space<vmem>>, %arg3: memref<1x128xf32, #tpu.memory_space<vmem>>, %arg4: memref<128x64xbf16, #tpu.memory_space<vmem>>, %arg5: memref<1x64xf32, #tpu.memory_space<vmem>>, %arg6: memref<32x64xbf16, #tpu.memory_space<vmem>>, %arg7: memref<32x1xf32, #tpu.memory_space<vmem>>, %arg8: memref<16x32xbf16, #tpu.memory_space<vmem>>, %arg9: memref<16x1xf32, #tpu.memory_space<vmem>>, %arg10: memref<8x16xbf16, #tpu.memory_space<vmem>>, %arg11: memref<8x1xf32, #tpu.memory_space<vmem>>, %arg12: memref<1x8xbf16, #tpu.memory_space<vmem>>, %arg13: memref<1x1xf32, #tpu.memory_space<vmem>>, %arg14: memref<1x1x128xf32, #tpu.memory_space<vmem>>) attributes {dimension_semantics = [#tpu.dimension_semantics<parallel>], iteration_bounds = array<i64: 1>, scalar_prefetch = 0 : i64, scratch_operands = 0 : i64, tpu.core_type = #tpu.core_type<tc>, window_params = [{transform_indices = @transform_0, window_bounds = array<i64: 128, 16>}, {pipeline_mode = #tpu.pipeline_mode<synchronous>, transform_indices = @transform_1, window_bounds = array<i64: 16, 128>}, {pipeline_mode = #tpu.pipeline_mode<synchronous>, transform_indices = @transform_2, window_bounds = array<i64: 1, 128>}, {pipeline_mode = #tpu.pipeline_mode<synchronous>, transform_indices = @transform_3, window_bounds = array<i64: 128, 64>}, {pipeline_mode = #tpu.pipeline_mode<synchronous>, transform_indices = @transform_4, window_bounds = array<i64: 1, 64>}, {pipeline_mode = #tpu.pipeline_mode<synchronous>, transform_indices = @transform_5, window_bounds = array<i64: 32, 64>}, {pipeline_mode = #tpu.pipeline_mode<synchronous>, transform_indices = @transform_6, window_bounds = array<i64: 32, 1>}, {pipeline_mode = #tpu.pipeline_mode<synchronous>, transform_indices = @transform_7, window_bounds = array<i64: 16, 32>}, {pipeline_mode = #tpu.pipeline_mode<synchronous>, transform_indices = @transform_8, window_bounds = array<i64: 16, 1>}, {pipeline_mode = #tpu.pipeline_mode<synchronous>, transform_indices = @transform_9, window_bounds = array<i64: 8, 16>}, {pipeline_mode = #tpu.pipeline_mode<synchronous>, transform_indices = @transform_10, window_bounds = array<i64: 8, 1>}, {pipeline_mode = #tpu.pipeline_mode<synchronous>, transform_indices = @transform_11, window_bounds = array<i64: 1, 8>}, {pipeline_mode = #tpu.pipeline_mode<synchronous>, transform_indices = @transform_12, window_bounds = array<i64: 1, 1>}, {transform_indices = @transform_13, window_bounds = array<i64: 1, 1, 128>}]} {
    %c0 = arith.constant 0 : index
    %c0_0 = arith.constant 0 : index
    %0 = vector.load %arg2[%c0, %c0_0] : memref<16x128xbf16, #tpu.memory_space<vmem>>, vector<16x128xbf16>
    %c0_1 = arith.constant 0 : index
    %c0_2 = arith.constant 0 : index
    %1 = vector.load %arg3[%c0_1, %c0_2] : memref<1x128xf32, #tpu.memory_space<vmem>>, vector<1x128xf32>
    %c0_3 = arith.constant 0 : index
    %c0_4 = arith.constant 0 : index
    %2 = vector.load %arg4[%c0_3, %c0_4] : memref<128x64xbf16, #tpu.memory_space<vmem>>, vector<128x64xbf16>
    %c0_5 = arith.constant 0 : index
    %c0_6 = arith.constant 0 : index
    %3 = vector.load %arg5[%c0_5, %c0_6] : memref<1x64xf32, #tpu.memory_space<vmem>>, vector<1x64xf32>
    %c0_7 = arith.constant 0 : index
    %c0_8 = arith.constant 0 : index
    %4 = vector.load %arg6[%c0_7, %c0_8] : memref<32x64xbf16, #tpu.memory_space<vmem>>, vector<32x64xbf16>
    %c0_9 = arith.constant 0 : index
    %c0_10 = arith.constant 0 : index
    %5 = vector.load %arg7[%c0_9, %c0_10] : memref<32x1xf32, #tpu.memory_space<vmem>>, vector<32x1xf32>
    %c0_11 = arith.constant 0 : index
    %c0_12 = arith.constant 0 : index
    %6 = vector.load %arg8[%c0_11, %c0_12] : memref<16x32xbf16, #tpu.memory_space<vmem>>, vector<16x32xbf16>
    %c0_13 = arith.constant 0 : index
    %c0_14 = arith.constant 0 : index
    %7 = vector.load %arg9[%c0_13, %c0_14] : memref<16x1xf32, #tpu.memory_space<vmem>>, vector<16x1xf32>
    %c0_15 = arith.constant 0 : index
    %c0_16 = arith.constant 0 : index
    %8 = vector.load %arg10[%c0_15, %c0_16] : memref<8x16xbf16, #tpu.memory_space<vmem>>, vector<8x16xbf16>
    %c0_17 = arith.constant 0 : index
    %c0_18 = arith.constant 0 : index
    %9 = vector.load %arg11[%c0_17, %c0_18] : memref<8x1xf32, #tpu.memory_space<vmem>>, vector<8x1xf32>
    %c0_19 = arith.constant 0 : index
    %c0_20 = arith.constant 0 : index
    %10 = vector.load %arg12[%c0_19, %c0_20] : memref<1x8xbf16, #tpu.memory_space<vmem>>, vector<1x8xbf16>
    %c0_21 = arith.constant 0 : index
    %c0_22 = arith.constant 0 : index
    %11 = vector.load %arg13[%c0_21, %c0_22] : memref<1x1xf32, #tpu.memory_space<vmem>>, vector<1x1xf32>
    %c0_23 = arith.constant 0 : index
    %c0_24 = arith.constant 0 : index
    %12 = vector.load %arg1[%c0_23, %c0_24] : memref<128x16xbf16, #tpu.memory_space<vmem>>, vector<128x16xbf16>
    %cst = arith.constant dense<0.000000e+00> : vector<128x128xf32>
    %13 = tpu.matmul %12, %0, %cst {dimension_numbers = #tpu.dot_dimension_numbers<[1], [0], [0], [1], [0, 0, 1, 1], [], []>} : vector<128x16xbf16>, vector<16x128xbf16>, vector<128x128xf32> -> vector<128x128xf32>
    %14 = vector.broadcast %1 : vector<1x128xf32> to vector<128x128xf32>
    %15 = arith.addf %13, %14 : vector<128x128xf32>
    %16 = arith.truncf %15 : vector<128x128xf32> to vector<128x128xbf16>
    %cst_25 = arith.constant 1.000980e-01 : bf16
    %17 = vector.broadcast %cst_25 : bf16 to vector<128x128xbf16>
    %18 = arith.mulf %17, %16 : vector<128x128xbf16>
    %19 = arith.maximumf %16, %18 : vector<128x128xbf16>
    %cst_26 = arith.constant dense<0.000000e+00> : vector<128x64xf32>
    %20 = tpu.matmul %19, %2, %cst_26 {dimension_numbers = #tpu.dot_dimension_numbers<[1], [0], [0], [1], [0, 0, 1, 1], [], []>} : vector<128x128xbf16>, vector<128x64xbf16>, vector<128x64xf32> -> vector<128x64xf32>
    %21 = vector.broadcast %3 : vector<1x64xf32> to vector<128x64xf32>
    %22 = arith.addf %20, %21 : vector<128x64xf32>
    %23 = arith.truncf %22 : vector<128x64xf32> to vector<128x64xbf16>
    %cst_27 = arith.constant 1.000980e-01 : bf16
    %24 = vector.broadcast %cst_27 : bf16 to vector<128x64xbf16>
    %25 = arith.mulf %24, %23 : vector<128x64xbf16>
    %26 = arith.maximumf %23, %25 : vector<128x64xbf16>
    %cst_28 = arith.constant dense<0.000000e+00> : vector<32x128xf32>
    %27 = tpu.matmul %4, %26, %cst_28 {dimension_numbers = #tpu.dot_dimension_numbers<[1], [1], [0], [0], [0, 0, 1, 0], [], []>} : vector<32x64xbf16>, vector<128x64xbf16>, vector<32x128xf32> -> vector<32x128xf32>
    %28 = vector.broadcast %5 : vector<32x1xf32> to vector<32x128xf32>
    %29 = arith.addf %27, %28 : vector<32x128xf32>
    %30 = arith.truncf %29 : vector<32x128xf32> to vector<32x128xbf16>
    %cst_29 = arith.constant 1.000980e-01 : bf16
    %31 = vector.broadcast %cst_29 : bf16 to vector<32x128xbf16>
    %32 = arith.mulf %31, %30 : vector<32x128xbf16>
    %33 = arith.maximumf %30, %32 : vector<32x128xbf16>
    %cst_30 = arith.constant dense<0.000000e+00> : vector<16x128xf32>
    %34 = tpu.matmul %6, %33, %cst_30 {dimension_numbers = #tpu.dot_dimension_numbers<[1], [0], [0], [1], [0, 0, 1, 1], [], []>} : vector<16x32xbf16>, vector<32x128xbf16>, vector<16x128xf32> -> vector<16x128xf32>
    %35 = vector.broadcast %7 : vector<16x1xf32> to vector<16x128xf32>
    %36 = arith.addf %34, %35 : vector<16x128xf32>
    %37 = arith.truncf %36 : vector<16x128xf32> to vector<16x128xbf16>
    %cst_31 = arith.constant 1.000980e-01 : bf16
    %38 = vector.broadcast %cst_31 : bf16 to vector<16x128xbf16>
    %39 = arith.mulf %38, %37 : vector<16x128xbf16>
    %40 = arith.maximumf %37, %39 : vector<16x128xbf16>
    %cst_32 = arith.constant dense<0.000000e+00> : vector<8x128xf32>
    %41 = tpu.matmul %8, %40, %cst_32 {dimension_numbers = #tpu.dot_dimension_numbers<[1], [0], [0], [1], [0, 0, 1, 1], [], []>} : vector<8x16xbf16>, vector<16x128xbf16>, vector<8x128xf32> -> vector<8x128xf32>
    %42 = vector.broadcast %9 : vector<8x1xf32> to vector<8x128xf32>
    %43 = arith.addf %41, %42 : vector<8x128xf32>
    %44 = arith.truncf %43 : vector<8x128xf32> to vector<8x128xbf16>
    %cst_33 = arith.constant 1.000980e-01 : bf16
    %45 = vector.broadcast %cst_33 : bf16 to vector<8x128xbf16>
    %46 = arith.mulf %45, %44 : vector<8x128xbf16>
    %47 = arith.maximumf %44, %46 : vector<8x128xbf16>
    %cst_34 = arith.constant dense<0.000000e+00> : vector<1x128xf32>
    %48 = tpu.matmul %10, %47, %cst_34 {dimension_numbers = #tpu.dot_dimension_numbers<[1], [0], [0], [1], [0, 0, 1, 1], [], []>} : vector<1x8xbf16>, vector<8x128xbf16>, vector<1x128xf32> -> vector<1x128xf32>
    %49 = vector.broadcast %11 : vector<1x1xf32> to vector<1x128xf32>
    %50 = arith.addf %48, %49 : vector<1x128xf32>
    %c0_35 = arith.constant 0 : index
    %c0_36 = arith.constant 0 : index
    %c0_37 = arith.constant 0 : index
    %51 = vector.load %arg14[%c0_35, %c0_36, %c0_37] : memref<1x1x128xf32, #tpu.memory_space<vmem>>, vector<1x1x128xf32>
    %52 = vector.shape_cast %51 : vector<1x1x128xf32> to vector<1x128xf32>
    %53 = vector.shape_cast %50 : vector<1x128xf32> to vector<1x1x128xf32>
    tpu.vector_store %arg14[%c0_35, %c0_36, %c0_37], %53 {strides = array<i32>} : memref<1x1x128xf32, #tpu.memory_space<vmem>>, vector<1x1x128xf32>,
    return
  }
  func.func @transform_0(%arg0: i32) -> (i32, i32) {
    %c0_i32 = arith.constant 0 : i32
    %c0_i32_0 = arith.constant 0 : i32
    return %arg0, %c0_i32 : i32, i32
  }
  func.func @transform_1(%arg0: i32) -> (i32, i32) {
    %c0_i32 = arith.constant 0 : i32
    %c0_i32_0 = arith.constant 0 : i32
    %c0_i32_1 = arith.constant 0 : i32
    return %c0_i32, %c0_i32_0 : i32, i32
  }
  func.func @transform_2(%arg0: i32) -> (i32, i32) {
    %c0_i32 = arith.constant 0 : i32
    %c0_i32_0 = arith.constant 0 : i32
    %c0_i32_1 = arith.constant 0 : i32
    return %c0_i32, %c0_i32_0 : i32, i32
  }
  func.func @transform_3(%arg0: i32) -> (i32, i32) {
    %c0_i32 = arith.constant 0 : i32
    %c0_i32_0 = arith.constant 0 : i32
    %c0_i32_1 = arith.constant 0 : i32
    return %c0_i32, %c0_i32_0 : i32, i32
  }
  func.func @transform_4(%arg0: i32) -> (i32, i32) {
    %c0_i32 = arith.constant 0 : i32
    %c0_i32_0 = arith.constant 0 : i32
    %c0_i32_1 = arith.constant 0 : i32
    return %c0_i32, %c0_i32_0 : i32, i32
  }
  func.func @transform_5(%arg0: i32) -> (i32, i32) {
    %c0_i32 = arith.constant 0 : i32
    %c0_i32_0 = arith.constant 0 : i32
    %c0_i32_1 = arith.constant 0 : i32
    return %c0_i32, %c0_i32_0 : i32, i32
  }
  func.func @transform_6(%arg0: i32) -> (i32, i32) {
    %c0_i32 = arith.constant 0 : i32
    %c0_i32_0 = arith.constant 0 : i32
    %c0_i32_1 = arith.constant 0 : i32
    return %c0_i32, %c0_i32_0 : i32, i32
  }
  func.func @transform_7(%arg0: i32) -> (i32, i32) {
    %c0_i32 = arith.constant 0 : i32
    %c0_i32_0 = arith.constant 0 : i32
    %c0_i32_1 = arith.constant 0 : i32
    return %c0_i32, %c0_i32_0 : i32, i32
  }
  func.func @transform_8(%arg0: i32) -> (i32, i32) {
    %c0_i32 = arith.constant 0 : i32
    %c0_i32_0 = arith.constant 0 : i32
    %c0_i32_1 = arith.constant 0 : i32
    return %c0_i32, %c0_i32_0 : i32, i32
  }
  func.func @transform_9(%arg0: i32) -> (i32, i32) {
    %c0_i32 = arith.constant 0 : i32
    %c0_i32_0 = arith.constant 0 : i32
    %c0_i32_1 = arith.constant 0 : i32
    return %c0_i32, %c0_i32_0 : i32, i32
  }
  func.func @transform_10(%arg0: i32) -> (i32, i32) {
    %c0_i32 = arith.constant 0 : i32
    %c0_i32_0 = arith.constant 0 : i32
    %c0_i32_1 = arith.constant 0 : i32
    return %c0_i32, %c0_i32_0 : i32, i32
  }
  func.func @transform_11(%arg0: i32) -> (i32, i32) {
    %c0_i32 = arith.constant 0 : i32
    %c0_i32_0 = arith.constant 0 : i32
    %c0_i32_1 = arith.constant 0 : i32
    return %c0_i32, %c0_i32_0 : i32, i32
  }
  func.func @transform_12(%arg0: i32) -> (i32, i32) {
    %c0_i32 = arith.constant 0 : i32
    %c0_i32_0 = arith.constant 0 : i32
    %c0_i32_1 = arith.constant 0 : i32
    return %c0_i32, %c0_i32_0 : i32, i32
  }
  func.func @transform_13(%arg0: i32) -> (i32, i32, i32) {
    %c0_i32 = arith.constant 0 : i32
    %c0_i32_0 = arith.constant 0 : i32
    %c0_i32_1 = arith.constant 0 : i32
    return %arg0, %c0_i32, %c0_i32_0 : i32, i32, i32
  }
}

</mosaic_0001>

<llo_original>
// kernel: tpu_custom_call.1
$region0: #{tpu_custom_call.1}
  #allocation0 [shape = 'u32[]', space=smem, size = 0x4, offset = 0x4, fixed_abs, tag = 'smem constant byte address 0x4 - core index']
  #allocation1 [shape = 'u32[72,128]{1,0:T(1,128)}', space=vmem, size = 0x9000, scoped, tag = 'internal scratch']
  #allocation2 [shape = 'f32[1,1]{1,0:T(1,128)S(1)}', space=vmem, size = 0x200, scoped, tag = 'scoped memory for tpu_custom_call.1']
  %s0 = inlined_call_operand.vmem [shape: bf16[128,16], index: 0, kind: input, shape index: {}]
  %s1 = inlined_call_operand.vmem [shape: bf16[16,128], index: 1, kind: input, shape index: {}]
  %s2 = inlined_call_operand.vmem [shape: f32[1,128], index: 2, kind: input, shape index: {}]
  %s3 = inlined_call_operand.vmem [shape: bf16[128,64], index: 3, kind: input, shape index: {}]
  %s4 = inlined_call_operand.vmem [shape: f32[1,64], index: 4, kind: input, shape index: {}]
  %s5 = inlined_call_operand.vmem [shape: bf16[32,64], index: 5, kind: input, shape index: {}]
  %s6 = inlined_call_operand.vmem [shape: f32[32,1], index: 6, kind: input, shape index: {}]
  %s7 = inlined_call_operand.vmem [shape: bf16[16,32], index: 7, kind: input, shape index: {}]
  %s8 = inlined_call_operand.vmem [shape: f32[16,1], index: 8, kind: input, shape index: {}]
  %s9 = inlined_call_operand.vmem [shape: bf16[8,16], index: 9, kind: input, shape index: {}]
  %s10 = inlined_call_operand.vmem [shape: f32[8,1], index: 10, kind: input, shape index: {}]
  %s11 = inlined_call_operand.vmem [shape: bf16[1,8], index: 11, kind: input, shape index: {}]
  %s12 = inlined_call_operand.<no memory space> [shape: f32[1,1], index: 12, kind: input, shape index: {}]
  %s13 = inlined_call_operand.hbm [shape: f32[1,1,128], index: 13, kind: output, shape index: {}]
  %s14 = sld [smem:[#allocation0]]
  $region62: #{tpu_custom_call.1} parent=0
    _
  %s16 = ssub.s32 1, %s14
  %s17 = scalar_select 0, %s16, %s14
  %v18 = vstv %s12
  %19 = vst [vmem:[#allocation2] sm:$0x1] %v18
  $region1: #{tpu_custom_call.1} parent=0
    #allocation3 [shape = 'u8[512]{0}', space=vmem, size = 0x400, scoped, tag = 'output window, operand 0, single buffered']
    #allocation4 [shape = 's32[1]{0}', space=sflag, size = 0x4, scoped, tag = 'scoped memory for tpu_custom_call.1']
    %20 = vsyncpa [#allocation4], 0
    // Predicated region
    $region2: #{tpu_custom_call.1} parent=1 // pred_check
      _
    $region3: #{tpu_custom_call.1} parent=1 // pred_check_branch
      %22 = sbr.rel (0) target = $region5
    $region4: #{tpu_custom_call.1} parent=1 // pred_region
      _
    $region5: #{tpu_custom_call.1} parent=1 // pred_fallthru
      _
    // Predicated region
    $region6: #{tpu_custom_call.1} parent=1 // pred_check
      _
    $region7: #{tpu_custom_call.1} parent=1 // pred_check_branch
      %24 = sbr.rel (0) target = $region9
    $region8: #{tpu_custom_call.1} parent=1 // pred_region
      _
    $region9: #{tpu_custom_call.1} parent=1 // pred_fallthru
      _
    // Predicated region
    $region10: #{tpu_custom_call.1} parent=1 // pred_check
      _
    $region11: #{tpu_custom_call.1} parent=1 // pred_check_branch
      %26 = sbr.rel (0) target = $region13
    $region12: #{tpu_custom_call.1} parent=1 // pred_region
      _
    $region13: #{tpu_custom_call.1} parent=1 // pred_fallthru
      _
    // Predicated region
    $region14: #{tpu_custom_call.1} parent=1 // pred_check
      _
    $region15: #{tpu_custom_call.1} parent=1 // pred_check_branch
      %28 = sbr.rel (0) target = $region17
    $region16: #{tpu_custom_call.1} parent=1 // pred_region
      _
    $region17: #{tpu_custom_call.1} parent=1 // pred_fallthru
      _
    // Predicated region
    $region18: #{tpu_custom_call.1} parent=1 // pred_check
      _
    $region19: #{tpu_custom_call.1} parent=1 // pred_check_branch
      %30 = sbr.rel (0) target = $region21
    $region20: #{tpu_custom_call.1} parent=1 // pred_region
      _
    $region21: #{tpu_custom_call.1} parent=1 // pred_fallthru
      _
    // Predicated region
    $region22: #{tpu_custom_call.1} parent=1 // pred_check
      _
    $region23: #{tpu_custom_call.1} parent=1 // pred_check_branch
      %32 = sbr.rel (0) target = $region25
    $region24: #{tpu_custom_call.1} parent=1 // pred_region
      _
    $region25: #{tpu_custom_call.1} parent=1 // pred_fallthru
      _
    // Predicated region
    $region26: #{tpu_custom_call.1} parent=1 // pred_check
      _
    $region27: #{tpu_custom_call.1} parent=1 // pred_check_branch
      %34 = sbr.rel (0) target = $region29
    $region28: #{tpu_custom_call.1} parent=1 // pred_region
      _
    $region29: #{tpu_custom_call.1} parent=1 // pred_fallthru
      _
    // Predicated region
    $region30: #{tpu_custom_call.1} parent=1 // pred_check
      _
    $region31: #{tpu_custom_call.1} parent=1 // pred_check_branch
      %36 = sbr.rel (0) target = $region33
    $region32: #{tpu_custom_call.1} parent=1 // pred_region
      _
    $region33: #{tpu_custom_call.1} parent=1 // pred_fallthru
      _
    // Predicated region
    $region34: #{tpu_custom_call.1} parent=1 // pred_check
      _
    $region35: #{tpu_custom_call.1} parent=1 // pred_check_branch
      %38 = sbr.rel (0) target = $region37
    $region36: #{tpu_custom_call.1} parent=1 // pred_region
      _
    $region37: #{tpu_custom_call.1} parent=1 // pred_fallthru
      _
    // Predicated region
    $region38: #{tpu_custom_call.1} parent=1 // pred_check
      _
    $region39: #{tpu_custom_call.1} parent=1 // pred_check_branch
      %40 = sbr.rel (0) target = $region41
    $region40: #{tpu_custom_call.1} parent=1 // pred_region
      _
    $region41: #{tpu_custom_call.1} parent=1 // pred_fallthru
      _
    // Predicated region
    $region42: #{tpu_custom_call.1} parent=1 // pred_check
      _
    $region43: #{tpu_custom_call.1} parent=1 // pred_check_branch
      %42 = sbr.rel (0) target = $region45
    $region44: #{tpu_custom_call.1} parent=1 // pred_region
      _
    $region45: #{tpu_custom_call.1} parent=1 // pred_fallthru
      _
    // Predicated region
    $region46: #{tpu_custom_call.1} parent=1 // pred_check
      _
    $region47: #{tpu_custom_call.1} parent=1 // pred_check_branch
      %44 = sbr.rel (0) target = $region49
    $region48: #{tpu_custom_call.1} parent=1 // pred_region
      _
    $region49: #{tpu_custom_call.1} parent=1 // pred_fallthru
      _
    // Predicated region
    $region50: #{tpu_custom_call.1} parent=1 // pred_check
      _
    $region51: #{tpu_custom_call.1} parent=1 // pred_check_branch
      %46 = sbr.rel (0) target = $region53
    $region52: #{tpu_custom_call.1} parent=1 // pred_region
      _
    $region53: #{tpu_custom_call.1} parent=1 // pred_fallthru
      _
    %v48 = vld [vmem:[%s1] sm:$0xf]
    %v49 = vld [vmem:[%s1 + $0x4] sm:$0xf]
    %v50 = vld [vmem:[%s2] sm:$0x1]
    %v51 = vld [vmem:[%s3] sm:$0xf]
    %v52 = vld [vmem:[%s3 + $0x4] sm:$0xf]
    %v53 = vld [vmem:[%s3 + $0x8] sm:$0xf]
    %v54 = vld [vmem:[%s3 + $0xc] sm:$0xf]
    %v55 = vld [vmem:[%s3 + $0x10] sm:$0xf]
    %v56 = vld [vmem:[%s3 + $0x14] sm:$0xf]
    %v57 = vld [vmem:[%s3 + $0x18] sm:$0xf]
    %v58 = vld [vmem:[%s3 + $0x1c] sm:$0xf]
    %v59 = vld [vmem:[%s3 + $0x20] sm:$0xf]
    %v60 = vld [vmem:[%s3 + $0x24] sm:$0xf]
    %v61 = vld [vmem:[%s3 + $0x28] sm:$0xf]
    %v62 = vld [vmem:[%s3 + $0x2c] sm:$0xf]
    %v63 = vld [vmem:[%s3 + $0x30] sm:$0xf]
    %v64 = vld [vmem:[%s3 + $0x34] sm:$0xf]
    %v65 = vld [vmem:[%s3 + $0x38] sm:$0xf]
    %v66 = vld [vmem:[%s3 + $0x3c] sm:$0xf]
    %v67 = vld [vmem:[%s4] sm:$0x1]
    %v68 = vld [vmem:[%s5] sm:$0xf]
    %v69 = vld [vmem:[%s5 + $0x4] sm:$0xf]
    %v70 = vld [vmem:[%s5 + $0x8] sm:$0xf]
    %v71 = vld [vmem:[%s5 + $0xc] sm:$0xf]
    %v72 = vld [vmem:[%s6] sm:$0xff]
    %v73 = vld [vmem:[%s6 + $0x8] sm:$0xff]
    %v74 = vld [vmem:[%s6 + $0x10] sm:$0xff]
    %v75 = vld [vmem:[%s6 + $0x18] sm:$0xff]
    %v76 = vld [vmem:[%s7] sm:$0xf]
    %v77 = vld [vmem:[%s7 + $0x4] sm:$0xf]
    %v78 = vld [vmem:[%s8] sm:$0xff]
    %v79 = vld [vmem:[%s8 + $0x8] sm:$0xff]
    %v80 = vld [vmem:[%s9] sm:$0xf]
    %v81 = vld [vmem:[%s10] sm:$0xff]
    %v82 = vld [vmem:[%s11] sm:$0x1]
    %v83 = vld [vmem:[#allocation2] sm:$0x1]
    %v84 = vld [vmem:[%s0] sm:$0xf]
    %v85 = vld [vmem:[%s0 + $0x4] sm:$0xf]
    %v86 = vld [vmem:[%s0 + $0x8] sm:$0xf]
    %v87 = vld [vmem:[%s0 + $0xc] sm:$0xf]
    %v88 = vld [vmem:[%s0 + $0x10] sm:$0xf]
    %v89 = vld [vmem:[%s0 + $0x14] sm:$0xf]
    %v90 = vld [vmem:[%s0 + $0x18] sm:$0xf]
    %v91 = vld [vmem:[%s0 + $0x1c] sm:$0xf]
    %v92 = vld [vmem:[%s0 + $0x20] sm:$0xf]
    %v93 = vld [vmem:[%s0 + $0x24] sm:$0xf]
    %v94 = vld [vmem:[%s0 + $0x28] sm:$0xf]
    %v95 = vld [vmem:[%s0 + $0x2c] sm:$0xf]
    %v96 = vld [vmem:[%s0 + $0x30] sm:$0xf]
    %v97 = vld [vmem:[%s0 + $0x34] sm:$0xf]
    %v98 = vld [vmem:[%s0 + $0x38] sm:$0xf]
    %v99 = vld [vmem:[%s0 + $0x3c] sm:$0xf]
    %v101 = vperm.slane %v50, 0
    %v119 = vunpack.c.l.b16 %v84
    %v120 = vunpack.c.l.b16 %v85
    %v121 = vunpack.c.l.b16 %v86
    %v122 = vunpack.c.l.b16 %v87
    %v123 = vunpack.c.l.b16 %v88
    %v124 = vunpack.c.l.b16 %v89
    %v125 = vunpack.c.l.b16 %v90
    %v126 = vunpack.c.l.b16 %v91
    %v127 = vunpack.c.l.b16 %v92
    %v128 = vunpack.c.l.b16 %v93
    %v129 = vunpack.c.l.b16 %v94
    %v130 = vunpack.c.l.b16 %v95
    %v131 = vunpack.c.l.b16 %v96
    %v132 = vunpack.c.l.b16 %v97
    %v133 = vunpack.c.l.b16 %v98
    %v134 = vunpack.c.l.b16 %v99
    %v135 = vpack.c.b16 %v120, %v119
    %v136 = vpack.c.b16 %v122, %v121
    %v137 = vpack.c.b16 %v124, %v123
    %v138 = vpack.c.b16 %v126, %v125
    %v139 = vpack.c.b16 %v128, %v127
    %v140 = vpack.c.b16 %v130, %v129
    %v141 = vpack.c.b16 %v132, %v131
    %v142 = vpack.c.b16 %v134, %v133
    %v145 = vunpack.c.l.b16 %v48
    %v146 = vunpack.c.l.b16 %v49
    %v147 = vpack.c.b16 %v146, %v145
    %vm149 = vcmask 130048
    %v151 = vsel %vm149, %v135, 0
    %v154 = vsel %vm149, %v136, 0
    %v157 = vsel %vm149, %v137, 0
    %v160 = vsel %vm149, %v138, 0
    %v163 = vsel %vm149, %v139, 0
    %v166 = vsel %vm149, %v140, 0
    %v169 = vsel %vm149, %v141, 0
    %v172 = vsel %vm149, %v142, 0
    %174 = vmatpush.bf16.msra.mxu0 0
    %175 = vmatpush.bf16.msra.mxu0 0
    %176 = vmatpush.bf16.msra.mxu0 0
    %177 = vmatpush.bf16.msra.mxu0 0
    %178 = vmatpush.bf16.msra.mxu0 0
    %179 = vmatpush.bf16.msra.mxu0 0
    %180 = vmatpush.bf16.msra.mxu0 0
    %181 = vmatpush.bf16.msra.mxu0 %v147
    %182 = vmatmul.bf16.gmra.mxu0 %v151
    %v183 = vpop.f32.mrf.mxu0
    %v184 = vadd.f32 %v101, %v183
    %v185 = vpop.f32.mrf.mxu0
    %v186 = vadd.f32 %v101, %v185
    %187 = vmatmul.bf16.gmra.mxu0 %v154
    %v188 = vpop.f32.mrf.mxu0
    %v189 = vadd.f32 %v101, %v188
    %v190 = vpop.f32.mrf.mxu0
    %v191 = vadd.f32 %v101, %v190
    %192 = vmatmul.bf16.gmra.mxu0 %v157
    %v193 = vpop.f32.mrf.mxu0
    %v194 = vadd.f32 %v101, %v193
    %v195 = vpop.f32.mrf.mxu0
    %v196 = vadd.f32 %v101, %v195
    %197 = vmatmul.bf16.gmra.mxu0 %v160
    %v198 = vpop.f32.mrf.mxu0
    %v199 = vadd.f32 %v101, %v198
    %v200 = vpop.f32.mrf.mxu0
    %v201 = vadd.f32 %v101, %v200
    %202 = vmatmul.bf16.gmra.mxu0 %v163
    %v203 = vpop.f32.mrf.mxu0
    %v204 = vadd.f32 %v101, %v203
    %v205 = vpop.f32.mrf.mxu0
    %v206 = vadd.f32 %v101, %v205
    %207 = vmatmul.bf16.gmra.mxu0 %v166
    %v208 = vpop.f32.mrf.mxu0
    %v209 = vadd.f32 %v101, %v208
    %v210 = vpop.f32.mrf.mxu0
    %v211 = vadd.f32 %v101, %v210
    %212 = vmatmul.bf16.gmra.mxu0 %v169
    %v213 = vpop.f32.mrf.mxu0
    %v214 = vadd.f32 %v101, %v213
    %v215 = vpop.f32.mrf.mxu0
    %v216 = vadd.f32 %v101, %v215
    %217 = vmatmul.bf16.gmra.mxu0 %v172
    %v218 = vpop.f32.mrf.mxu0
    %v219 = vadd.f32 %v101, %v218
    %v220 = vpop.f32.mrf.mxu0
    %v221 = vadd.f32 %v101, %v220
    %222 = vdwg.mxu0
    %v223 = vpack.c.bf16 %v184, %v184
    %v224 = vpack.c.bf16 %v186, %v186
    %v225 = vpack.c.bf16 %v189, %v189
    %v226 = vpack.c.bf16 %v191, %v191
    %v227 = vpack.c.bf16 %v194, %v194
    %v228 = vpack.c.bf16 %v196, %v196
    %v229 = vpack.c.bf16 %v199, %v199
    %v230 = vpack.c.bf16 %v201, %v201
    %v231 = vpack.c.bf16 %v204, %v204
    %v232 = vpack.c.bf16 %v206, %v206
    %v233 = vpack.c.bf16 %v209, %v209
    %v234 = vpack.c.bf16 %v211, %v211
    %v235 = vpack.c.bf16 %v214, %v214
    %v236 = vpack.c.bf16 %v216, %v216
    %v237 = vpack.c.bf16 %v219, %v219
    %v238 = vpack.c.bf16 %v221, %v221
    %v239 = vunpack.c.l.bf16 %v223
    %v240 = vunpack.c.l.bf16 %v224
    %v241 = vunpack.c.l.bf16 %v225
    %v242 = vunpack.c.l.bf16 %v226
    %v243 = vunpack.c.l.bf16 %v227
    %v244 = vunpack.c.l.bf16 %v228
    %v245 = vunpack.c.l.bf16 %v229
    %v246 = vunpack.c.l.bf16 %v230
    %v247 = vunpack.c.l.bf16 %v231
    %v248 = vunpack.c.l.bf16 %v232
    %v249 = vunpack.c.l.bf16 %v233
    %v250 = vunpack.c.l.bf16 %v234
    %v251 = vunpack.c.l.bf16 %v235
    %v252 = vunpack.c.l.bf16 %v236
    %v253 = vunpack.c.l.bf16 %v237
    %v254 = vunpack.c.l.bf16 %v238
    %v255 = vmul.f32 %v239, 0.100097656
    %v256 = vmul.f32 %v240, 0.100097656
    %v257 = vmul.f32 %v241, 0.100097656
    %v258 = vmul.f32 %v242, 0.100097656
    %v259 = vmul.f32 %v243, 0.100097656
    %v260 = vmul.f32 %v244, 0.100097656
    %v261 = vmul.f32 %v245, 0.100097656
    %v262 = vmul.f32 %v246, 0.100097656
    %v263 = vmul.f32 %v247, 0.100097656
    %v264 = vmul.f32 %v248, 0.100097656
    %v265 = vmul.f32 %v249, 0.100097656
    %v266 = vmul.f32 %v250, 0.100097656
    %v267 = vmul.f32 %v251, 0.100097656
    %v268 = vmul.f32 %v252, 0.100097656
    %v269 = vmul.f32 %v253, 0.100097656
    %v270 = vmul.f32 %v254, 0.100097656
    %v271 = vpack.c.bf16 %v255, %v255
    %v272 = vpack.c.bf16 %v256, %v256
    %v273 = vpack.c.bf16 %v257, %v257
    %v274 = vpack.c.bf16 %v258, %v258
    %v275 = vpack.c.bf16 %v259, %v259
    %v276 = vpack.c.bf16 %v260, %v260
    %v277 = vpack.c.bf16 %v261, %v261
    %v278 = vpack.c.bf16 %v262, %v262
    %v279 = vpack.c.bf16 %v263, %v263
    %v280 = vpack.c.bf16 %v264, %v264
    %v281 = vpack.c.bf16 %v265, %v265
    %v282 = vpack.c.bf16 %v266, %v266
    %v283 = vpack.c.bf16 %v267, %v267
    %v284 = vpack.c.bf16 %v268, %v268
    %v285 = vpack.c.bf16 %v269, %v269
    %v286 = vpack.c.bf16 %v270, %v270
    %v287 = vunpack.c.l.bf16 %v271
    %v288 = vunpack.c.l.bf16 %v272
    %v289 = vunpack.c.l.bf16 %v273
    %v290 = vunpack.c.l.bf16 %v274
    %v291 = vunpack.c.l.bf16 %v275
    %v292 = vunpack.c.l.bf16 %v276
    %v293 = vunpack.c.l.bf16 %v277
    %v294 = vunpack.c.l.bf16 %v278
    %v295 = vunpack.c.l.bf16 %v279
    %v296 = vunpack.c.l.bf16 %v280
    %v297 = vunpack.c.l.bf16 %v281
    %v298 = vunpack.c.l.bf16 %v282
    %v299 = vunpack.c.l.bf16 %v283
    %v300 = vunpack.c.l.bf16 %v284
    %v301 = vunpack.c.l.bf16 %v285
    %v302 = vunpack.c.l.bf16 %v286
    %v303 = vmax.f32 %v239, %v287
    %v304 = vmax.f32 %v240, %v288
    %v305 = vmax.f32 %v241, %v289
    %v306 = vmax.f32 %v242, %v290
    %v307 = vmax.f32 %v243, %v291
    %v308 = vmax.f32 %v244, %v292
    %v309 = vmax.f32 %v245, %v293
    %v310 = vmax.f32 %v246, %v294
    %v311 = vmax.f32 %v247, %v295
    %v312 = vmax.f32 %v248, %v296
    %v313 = vmax.f32 %v249, %v297
    %v314 = vmax.f32 %v250, %v298
    %v315 = vmax.f32 %v251, %v299
    %v316 = vmax.f32 %v252, %v300
    %v317 = vmax.f32 %v253, %v301
    %v318 = vmax.f32 %v254, %v302
    %v319 = vpack.c.bf16 %v304, %v303
    %v320 = vpack.c.bf16 %v306, %v305
    %v321 = vpack.c.bf16 %v308, %v307
    %v322 = vpack.c.bf16 %v310, %v309
    %v323 = vpack.c.bf16 %v312, %v311
    %v324 = vpack.c.bf16 %v314, %v313
    %v325 = vpack.c.bf16 %v316, %v315
    %v326 = vpack.c.bf16 %v318, %v317
    %v328 = vperm.slane %v67, 0
    %v346 = vunpack.c.l.b16 %v51
    %v347 = vunpack.c.l.b16 %v52
    %v348 = vunpack.c.l.b16 %v53
    %v349 = vunpack.c.l.b16 %v54
    %v350 = vunpack.c.l.b16 %v55
    %v351 = vunpack.c.l.b16 %v56
    %v352 = vunpack.c.l.b16 %v57
    %v353 = vunpack.c.l.b16 %v58
    %v354 = vunpack.c.l.b16 %v59
    %v355 = vunpack.c.l.b16 %v60
    %v356 = vunpack.c.l.b16 %v61
    %v357 = vunpack.c.l.b16 %v62
    %v358 = vunpack.c.l.b16 %v63
    %v359 = vunpack.c.l.b16 %v64
    %v360 = vunpack.c.l.b16 %v65
    %v361 = vunpack.c.l.b16 %v66
    %v362 = vpack.c.b16 %v347, %v346
    %v363 = vpack.c.b16 %v349, %v348
    %v364 = vpack.c.b16 %v351, %v350
    %v365 = vpack.c.b16 %v353, %v352
    %v366 = vpack.c.b16 %v355, %v354
    %v367 = vpack.c.b16 %v357, %v356
    %v368 = vpack.c.b16 %v359, %v358
    %v369 = vpack.c.b16 %v361, %v360
    %378 = vmatpush.bf16.msra.mxu0 %v369
    %379 = vmatpush.bf16.msra.mxu0 %v368
    %380 = vmatpush.bf16.msra.mxu0 %v367
    %381 = vmatpush.bf16.msra.mxu0 %v366
    %382 = vmatpush.bf16.msra.mxu0 %v365
    %383 = vmatpush.bf16.msra.mxu0 %v364
    %384 = vmatpush.bf16.msra.mxu0 %v363
    %385 = vmatpush.bf16.msra.mxu0 %v362
    %386 = vmatmul.bf16.gmra.mxu0 %v319
    %v387 = vpop.f32.mrf.mxu0
    %v388 = vadd.f32 %v328, %v387
    %v389 = vpop.f32.mrf.mxu0
    %v390 = vadd.f32 %v328, %v389
    %391 = vmatmul.bf16.gmra.mxu0 %v320
    %v392 = vpop.f32.mrf.mxu0
    %v393 = vadd.f32 %v328, %v392
    %v394 = vpop.f32.mrf.mxu0
    %v395 = vadd.f32 %v328, %v394
    %396 = vmatmul.bf16.gmra.mxu0 %v321
    %v397 = vpop.f32.mrf.mxu0
    %v398 = vadd.f32 %v328, %v397
    %v399 = vpop.f32.mrf.mxu0
    %v400 = vadd.f32 %v328, %v399
    %401 = vmatmul.bf16.gmra.mxu0 %v322
    %v402 = vpop.f32.mrf.mxu0
    %v403 = vadd.f32 %v328, %v402
    %v404 = vpop.f32.mrf.mxu0
    %v405 = vadd.f32 %v328, %v404
    %406 = vmatmul.bf16.gmra.mxu0 %v323
    %v407 = vpop.f32.mrf.mxu0
    %v408 = vadd.f32 %v328, %v407
    %v409 = vpop.f32.mrf.mxu0
    %v410 = vadd.f32 %v328, %v409
    %411 = vmatmul.bf16.gmra.mxu0 %v324
    %v412 = vpop.f32.mrf.mxu0
    %v413 = vadd.f32 %v328, %v412
    %v414 = vpop.f32.mrf.mxu0
    %v415 = vadd.f32 %v328, %v414
    %416 = vmatmul.bf16.gmra.mxu0 %v325
    %v417 = vpop.f32.mrf.mxu0
    %v418 = vadd.f32 %v328, %v417
    %v419 = vpop.f32.mrf.mxu0
    %v420 = vadd.f32 %v328, %v419
    %421 = vmatmul.bf16.gmra.mxu0 %v326
    %v422 = vpop.f32.mrf.mxu0
    %v423 = vadd.f32 %v328, %v422
    %v424 = vpop.f32.mrf.mxu0
    %v425 = vadd.f32 %v328, %v424
    %426 = vdwg.mxu0
    %v427 = vpack.c.bf16 %v388, %v388
    %v428 = vpack.c.bf16 %v390, %v390
    %v429 = vpack.c.bf16 %v393, %v393
    %v430 = vpack.c.bf16 %v395, %v395
    %v431 = vpack.c.bf16 %v398, %v398
    %v432 = vpack.c.bf16 %v400, %v400
    %v433 = vpack.c.bf16 %v403, %v403
    %v434 = vpack.c.bf16 %v405, %v405
    %v435 = vpack.c.bf16 %v408, %v408
    %v436 = vpack.c.bf16 %v410, %v410
    %v437 = vpack.c.bf16 %v413, %v413
    %v438 = vpack.c.bf16 %v415, %v415
    %v439 = vpack.c.bf16 %v418, %v418
    %v440 = vpack.c.bf16 %v420, %v420
    %v441 = vpack.c.bf16 %v423, %v423
    %v442 = vpack.c.bf16 %v425, %v425
    %v443 = vunpack.c.l.bf16 %v427
    %v444 = vunpack.c.l.bf16 %v428
    %v445 = vunpack.c.l.bf16 %v429
    %v446 = vunpack.c.l.bf16 %v430
    %v447 = vunpack.c.l.bf16 %v431
    %v448 = vunpack.c.l.bf16 %v432
    %v449 = vunpack.c.l.bf16 %v433
    %v450 = vunpack.c.l.bf16 %v434
    %v451 = vunpack.c.l.bf16 %v435
    %v452 = vunpack.c.l.bf16 %v436
    %v453 = vunpack.c.l.bf16 %v437
    %v454 = vunpack.c.l.bf16 %v438
    %v455 = vunpack.c.l.bf16 %v439
    %v456 = vunpack.c.l.bf16 %v440
    %v457 = vunpack.c.l.bf16 %v441
    %v458 = vunpack.c.l.bf16 %v442
    %v459 = vmul.f32 %v443, 0.100097656
    %v460 = vmul.f32 %v444, 0.100097656
    %v461 = vmul.f32 %v445, 0.100097656
    %v462 = vmul.f32 %v446, 0.100097656
    %v463 = vmul.f32 %v447, 0.100097656
    %v464 = vmul.f32 %v448, 0.100097656
    %v465 = vmul.f32 %v449, 0.100097656
    %v466 = vmul.f32 %v450, 0.100097656
    %v467 = vmul.f32 %v451, 0.100097656
    %v468 = vmul.f32 %v452, 0.100097656
    %v469 = vmul.f32 %v453, 0.100097656
    %v470 = vmul.f32 %v454, 0.100097656
    %v471 = vmul.f32 %v455, 0.100097656
    %v472 = vmul.f32 %v456, 0.100097656
    %v473 = vmul.f32 %v457, 0.100097656
    %v474 = vmul.f32 %v458, 0.100097656
    %v475 = vpack.c.bf16 %v459, %v459
    %v476 = vpack.c.bf16 %v460, %v460
    %v477 = vpack.c.bf16 %v461, %v461
    %v478 = vpack.c.bf16 %v462, %v462
    %v479 = vpack.c.bf16 %v463, %v463
    %v480 = vpack.c.bf16 %v464, %v464
    %v481 = vpack.c.bf16 %v465, %v465
    %v482 = vpack.c.bf16 %v466, %v466
    %v483 = vpack.c.bf16 %v467, %v467
    %v484 = vpack.c.bf16 %v468, %v468
    %v485 = vpack.c.bf16 %v469, %v469
    %v486 = vpack.c.bf16 %v470, %v470
    %v487 = vpack.c.bf16 %v471, %v471
    %v488 = vpack.c.bf16 %v472, %v472
    %v489 = vpack.c.bf16 %v473, %v473
    %v490 = vpack.c.bf16 %v474, %v474
    %v491 = vunpack.c.l.bf16 %v475
    %v492 = vunpack.c.l.bf16 %v476
    %v493 = vunpack.c.l.bf16 %v477
    %v494 = vunpack.c.l.bf16 %v478
    %v495 = vunpack.c.l.bf16 %v479
    %v496 = vunpack.c.l.bf16 %v480
    %v497 = vunpack.c.l.bf16 %v481
    %v498 = vunpack.c.l.bf16 %v482
    %v499 = vunpack.c.l.bf16 %v483
    %v500 = vunpack.c.l.bf16 %v484
    %v501 = vunpack.c.l.bf16 %v485
    %v502 = vunpack.c.l.bf16 %v486
    %v503 = vunpack.c.l.bf16 %v487
    %v504 = vunpack.c.l.bf16 %v488
    %v505 = vunpack.c.l.bf16 %v489
    %v506 = vunpack.c.l.bf16 %v490
    %v507 = vmax.f32 %v443, %v491
    %v508 = vmax.f32 %v444, %v492
    %v509 = vmax.f32 %v445, %v493
    %v510 = vmax.f32 %v446, %v494
    %v511 = vmax.f32 %v447, %v495
    %v512 = vmax.f32 %v448, %v496
    %v513 = vmax.f32 %v449, %v497
    %v514 = vmax.f32 %v450, %v498
    %v515 = vmax.f32 %v451, %v499
    %v516 = vmax.f32 %v452, %v500
    %v517 = vmax.f32 %v453, %v501
    %v518 = vmax.f32 %v454, %v502
    %v519 = vmax.f32 %v455, %v503
    %v520 = vmax.f32 %v456, %v504
    %v521 = vmax.f32 %v457, %v505
    %v522 = vmax.f32 %v458, %v506
    %v523 = vpack.c.bf16 %v508, %v507
    %v524 = vpack.c.bf16 %v510, %v509
    %v525 = vpack.c.bf16 %v512, %v511
    %v526 = vpack.c.bf16 %v514, %v513
    %v527 = vpack.c.bf16 %v516, %v515
    %v528 = vpack.c.bf16 %v518, %v517
    %v529 = vpack.c.bf16 %v520, %v519
    %v530 = vpack.c.bf16 %v522, %v521
    %532 = vset.pattern.permute.xlu0 0
    %533 = vperm.xlu0 %532, %v72
    %v534 = vpop.permute.xlu0 %533
    %537 = vset.pattern.permute.xlu0 0
    %538 = vperm.xlu0 %537, %v73
    %v539 = vpop.permute.xlu0 %538
    %542 = vset.pattern.permute.xlu0 0
    %543 = vperm.xlu0 %542, %v74
    %v544 = vpop.permute.xlu0 %543
    %547 = vset.pattern.permute.xlu0 0
    %548 = vperm.xlu0 %547, %v75
    %v549 = vpop.permute.xlu0 %548
    %v555 = vunpack.c.l.b16 %v68
    %v556 = vunpack.c.l.b16 %v69
    %v557 = vunpack.c.l.b16 %v70
    %v558 = vunpack.c.l.b16 %v71
    %v559 = vpack.c.b16 %v556, %v555
    %v560 = vpack.c.b16 %v558, %v557
    %vm561 = vcmask 523264
    %v563 = vsel %vm561, %v559, 0
    %v566 = vsel %vm561, %v560, 0
    %v569 = vsel %vm561, %v523, 0
    %v572 = vsel %vm561, %v524, 0
    %v575 = vsel %vm561, %v525, 0
    %v578 = vsel %vm561, %v526, 0
    %v581 = vsel %vm561, %v527, 0
    %v584 = vsel %vm561, %v528, 0
    %v587 = vsel %vm561, %v529, 0
    %v590 = vsel %vm561, %v530, 0
    %592 = vmatpush.bf16.xpose.msra.mxu0 %v590
    %593 = vmatpush.bf16.xpose.msra.mxu0 %v587
    %594 = vmatpush.bf16.xpose.msra.mxu0 %v584
    %595 = vmatpush.bf16.xpose.msra.mxu0 %v581
    %596 = vmatpush.bf16.xpose.msra.mxu0 %v578
    %597 = vmatpush.bf16.xpose.msra.mxu0 %v575
    %598 = vmatpush.bf16.xpose.msra.mxu0 %v572
    %599 = vmatpush.bf16.xpose.msra.mxu0 %v569
    %600 = vmatmul.bf16.gmra.mxu0 %v563
    %v601 = vpop.f32.mrf.mxu0
    %v602 = vadd.f32 %v534, %v601
    %v603 = vpop.f32.mrf.mxu0
    %v604 = vadd.f32 %v539, %v603
    %605 = vmatmul.bf16.gmra.mxu0 %v566
    %v606 = vpop.f32.mrf.mxu0
    %v607 = vadd.f32 %v544, %v606
    %v608 = vpop.f32.mrf.mxu0
    %v609 = vadd.f32 %v549, %v608
    %610 = vdwg.mxu0
    %v611 = vpack.c.bf16 %v602, %v602
    %v612 = vpack.c.bf16 %v604, %v604
    %v613 = vpack.c.bf16 %v607, %v607
    %v614 = vpack.c.bf16 %v609, %v609
    %v615 = vunpack.c.l.bf16 %v611
    %v616 = vunpack.c.l.bf16 %v612
    %v617 = vunpack.c.l.bf16 %v613
    %v618 = vunpack.c.l.bf16 %v614
    %v619 = vmul.f32 %v615, 0.100097656
    %v620 = vmul.f32 %v616, 0.100097656
    %v621 = vmul.f32 %v617, 0.100097656
    %v622 = vmul.f32 %v618, 0.100097656
    %v623 = vpack.c.bf16 %v619, %v619
    %v624 = vpack.c.bf16 %v620, %v620
    %v625 = vpack.c.bf16 %v621, %v621
    %v626 = vpack.c.bf16 %v622, %v622
    %v627 = vunpack.c.l.bf16 %v623
    %v628 = vunpack.c.l.bf16 %v624
    %v629 = vunpack.c.l.bf16 %v625
    %v630 = vunpack.c.l.bf16 %v626
    %v631 = vmax.f32 %v615, %v627
    %v632 = vmax.f32 %v616, %v628
    %v633 = vmax.f32 %v617, %v629
    %v634 = vmax.f32 %v618, %v630
    %v635 = vpack.c.bf16 %v632, %v631
    %v636 = vpack.c.bf16 %v634, %v633
    %638 = vset.pattern.permute.xlu0 0
    %639 = vperm.xlu0 %638, %v78
    %v640 = vpop.permute.xlu0 %639
    %643 = vset.pattern.permute.xlu0 0
    %644 = vperm.xlu0 %643, %v79
    %v645 = vpop.permute.xlu0 %644
    %v649 = vunpack.c.l.b16 %v76
    %v650 = vunpack.c.l.b16 %v77
    %v651 = vpack.c.b16 %v650, %v649
    %vm652 = vcmask 261120
    %v654 = vsel %vm652, %v651, 0
    %656 = vmatpush.bf16.msra.mxu0 0
    %657 = vmatpush.bf16.msra.mxu0 0
    %658 = vmatpush.bf16.msra.mxu0 0
    %659 = vmatpush.bf16.msra.mxu0 0
    %660 = vmatpush.bf16.msra.mxu0 0
    %661 = vmatpush.bf16.msra.mxu0 0
    %662 = vmatpush.bf16.msra.mxu0 %v636
    %663 = vmatpush.bf16.msra.mxu0 %v635
    %664 = vmatmul.bf16.gmra.mxu0 %v654
    %v665 = vpop.f32.mrf.mxu0
    %v666 = vadd.f32 %v640, %v665
    %v667 = vpop.f32.mrf.mxu0
    %v668 = vadd.f32 %v645, %v667
    %669 = vdwg.mxu0
    %v670 = vpack.c.bf16 %v666, %v666
    %v671 = vpack.c.bf16 %v668, %v668
    %v672 = vunpack.c.l.bf16 %v670
    %v673 = vunpack.c.l.bf16 %v671
    %v674 = vmul.f32 %v672, 0.100097656
    %v675 = vmul.f32 %v673, 0.100097656
    %v676 = vpack.c.bf16 %v674, %v674
    %v677 = vpack.c.bf16 %v675, %v675
    %v678 = vunpack.c.l.bf16 %v676
    %v679 = vunpack.c.l.bf16 %v677
    %v680 = vmax.f32 %v672, %v678
    %v681 = vmax.f32 %v673, %v679
    %v682 = vpack.c.bf16 %v681, %v680
    %684 = vset.pattern.permute.xlu0 0
    %685 = vperm.xlu0 %684, %v81
    %v686 = vpop.permute.xlu0 %685
    %v689 = vsel %vm149, %v80, 0
    %691 = vmatpush.bf16.msra.mxu0 0
    %692 = vmatpush.bf16.msra.mxu0 0
    %693 = vmatpush.bf16.msra.mxu0 0
    %694 = vmatpush.bf16.msra.mxu0 0
    %695 = vmatpush.bf16.msra.mxu0 0
    %696 = vmatpush.bf16.msra.mxu0 0
    %697 = vmatpush.bf16.msra.mxu0 0
    %698 = vmatpush.bf16.msra.mxu0 %v682
    %699 = vmatmul.bf16.gmra.mxu0 %v689
    %v700 = vpop.f32.mrf.mxu0
    %v701 = vadd.f32 %v686, %v700
    %v702 = vpop.f32.mrf.mxu0
    %703 = vdwg.mxu0
    %v704 = vpack.c.bf16 %v701, %v701
    %v705 = vunpack.c.l.bf16 %v704
    %v706 = vmul.f32 %v705, 0.100097656
    %v707 = vpack.c.bf16 %v706, %v706
    %v708 = vunpack.c.l.bf16 %v707
    %v709 = vmax.f32 %v705, %v708
    %v710 = vpack.c.bf16 %v709, %v709
    %712 = vset.pattern.permute.xlu0 0
    %713 = vperm.xlu0 %712, %v83
    %v714 = vpop.permute.xlu0 %713
    %v716 = vperm.slane %v714, 0
    %vm717 = vcmask 64512
    %v719 = vsel %vm717, %v82, 0
    %vm721 = vcmask 1043456
    %v723 = vsel %vm721, %v710, 0
    %725 = vmatpush.bf16.msra.mxu0 0
    %726 = vmatpush.bf16.msra.mxu0 0
    %727 = vmatpush.bf16.msra.mxu0 0
    %728 = vmatpush.bf16.msra.mxu0 0
    %729 = vmatpush.bf16.msra.mxu0 0
    %730 = vmatpush.bf16.msra.mxu0 0
    %731 = vmatpush.bf16.msra.mxu0 0
    %732 = vmatpush.bf16.msra.mxu0 %v723
    %733 = vmatmul.bf16.gmra.mxu0 %v719
    %v734 = vpop.f32.mrf.mxu0
    %v735 = vadd.f32 %v716, %v734
    %v736 = vpop.f32.mrf.mxu0
    %737 = vdwg.mxu0
    %738 = vst [vmem:[#allocation3] sm:$0x1] %v735
    // Predicated region
    $region54: #{tpu_custom_call.1} parent=1 // pred_check
      _
    $region55: #{tpu_custom_call.1} parent=1 // pred_check_branch
      %740 = sbr.rel (0) target = $region57
    $region56: #{tpu_custom_call.1} parent=1 // pred_region
      %742 = vsyncadd [#allocation4], 0
      %s744 = sshll.u32 [#allocation3], 4
      %s745 = int_to_ptr.vmem [resolvable:$true] %s744
      %s746 = sshll.u32 %s13, 4
      %s747 = int_to_ptr.hbm [resolvable:$true] %s746
      %749 = dma.vmem_to_hbm [thread:$0]  %s745, 16, %s747, [#allocation4]
    $region57: #{tpu_custom_call.1} parent=1 // pred_fallthru
      _
    // Predicated region
    $region58: #{tpu_custom_call.1} parent=1 // pred_check
      _
    $region59: #{tpu_custom_call.1} parent=1 // pred_check_branch
      %751 = sbr.rel (0) target = $region61
    $region60: #{tpu_custom_call.1} parent=1 // pred_region
      %753 = dma.done [#allocation4], 16
    $region61: #{tpu_custom_call.1} parent=1 // pred_fallthru
      _
    %754 = vsyncpa [#allocation4], 1

</llo_original>
